<compile_context>
chip_gen: v7x
topology: tpu7x:2x2x1
jax: 0.10.0
libtpu: 0.0.40
codegen_flags: <defaults>
</compile_context>

<pallas_src>
import functools

import jax
import jax.numpy as jnp
from jax.experimental import pallas as pl
from jax.experimental.pallas import tpu as pltpu


def _qwen_mlp_kernel(x_ref, wgu_ref, wd_ref, o_ref, acc_ref, *, ti):
    # x_ref:   (tm, H)     token tile (resident across the I axis)
    # wgu_ref: (H, 2*ti)   fused [gate | up] weight tile (single DMA stream)
    # wd_ref:  (ti, H)     down (c_proj) weight tile
    # o_ref:   (tm, H)     output tile (resident across the I axis)
    # acc_ref: (tm, H)     f32 accumulator scratch
    j = pl.program_id(1)

    x = x_ref[...]
    gu = jnp.dot(x, wgu_ref[...], preferred_element_type=jnp.float32)  # (tm, 2*ti)
    gate = gu[:, :ti]
    up = gu[:, ti:]
    # SiluAndMul: silu(gate) * up, in f32.
    h = (gate * jax.nn.sigmoid(gate)) * up
    part = jnp.dot(h.astype(wd_ref.dtype), wd_ref[...],
                   preferred_element_type=jnp.float32)

    @pl.when(j == 0)
    def _():
        acc_ref[...] = part          # write directly; no zero-init + RMW

    @pl.when(j > 0)
    def _():
        acc_ref[...] += part

    @pl.when(j == pl.num_programs(1) - 1)
    def _():
        o_ref[...] = acc_ref[...].astype(o_ref.dtype)


def _round_up(v, m):
    return ((v + m - 1) // m) * m


def _generation_params():
    """Per-TPU-generation defaults: token tile, max intermediate tile, VMEM budget."""
    kind = ""
    try:
        kind = jax.devices()[0].device_kind.lower()
    except Exception:
        pass
    if ("v5 lite" in kind) or ("v5e" in kind) or ("v5lite" in kind):
        # 128 MiB physical VMEM, ~820 GB/s HBM -> big tm, moderate ti.
        # TODO(synk): bf16-only fast path and pl.Buffered(3) on the weight
        # BlockSpecs to hide weight-DMA latency on v5e decode.
        return dict(tm=256, ti_max=512, vmem=96 * 1024 * 1024)
    if "v6" in kind:
        # 128 MiB physical VMEM, ~1.4 TB/s HBM.
        return dict(tm=256, ti_max=1024, vmem=100 * 1024 * 1024)
    if "v7" in kind:
        # Only 64 MiB physical VMEM per TC: cap ti and leave compiler headroom.
        # TODO(synk): for decode (single token tile) split the I reduction
        # across the two TensorCores to use both cores' DMA bandwidth.
        return dict(tm=256, ti_max=512, vmem=56 * 1024 * 1024)
    # Unknown generation: conservative defaults.
    return dict(tm=256, ti_max=512, vmem=64 * 1024 * 1024)


def _pick_ti(I, H, tm, w_itemsize, x_itemsize, ti_max, vmem_budget):
    """Largest intermediate tile whose double-buffered weight tiles fit VMEM."""
    # Resident / double-buffered non-weight footprint: x + out (2x each) + f32 acc.
    fixed = 2 * tm * H * x_itemsize * 2 + tm * H * 4
    budget = int(vmem_budget * 0.70) - fixed
    ti = 128
    for cand in (1024, 512, 256, 128):
        if cand > ti_max:
            continue
        # double-buffered fused gate/up tile (H, 2*cand) + down tile (cand, H)
        per_step = 2 * (H * 2 * cand + cand * H) * w_itemsize
        if per_step <= budget:
            ti = cand
            break
    # Never use a tile larger than the (128-rounded) intermediate size itself.
    ti = min(ti, max(128, _round_up(I, 128)))
    return ti


def _pack_gate_up(w_gate, w_up, ti, I_pad):
    """Interleave gate/up per I-tile -> [H, n_tiles * 2*ti] so one BlockSpec
    block (H, 2*ti) fetches both the gate and the up tile."""
    H, I = w_gate.shape
    if I_pad != I:
        w_gate = jnp.pad(w_gate, ((0, 0), (0, I_pad - I)))
        w_up = jnp.pad(w_up, ((0, 0), (0, I_pad - I)))
    nt = I_pad // ti
    wgu = jnp.concatenate(
        [w_gate.reshape(H, nt, ti), w_up.reshape(H, nt, ti)], axis=2
    ).reshape(H, nt * 2 * ti)
    return wgu


def qwen_mlp(x, w_gate, w_up, w_down, *, tm=None, ti=None):
    """x: [..., H], w_gate/w_up: [H, I], w_down: [I, H] -> [..., H]."""
    orig_shape = x.shape
    H = orig_shape[-1]
    x2 = x.reshape(-1, H)
    T = x2.shape[0]

    Hg, I = w_gate.shape
    assert Hg == H and w_up.shape == (H, I), "gate/up weight shape mismatch"
    assert w_down.shape == (I, H), "down weight shape mismatch"

    params = _generation_params()
    if tm is None:
        tm = params["tm"]

    # Token tile: large (HBM-traffic-friendly) for prefill; shrink (16-aligned)
    # for small / decode-style T so the grid just streams weight tiles over one
    # resident x tile.
    tm_eff = min(tm, max(16, _round_up(T, 16)))
    T_pad = _round_up(T, tm_eff)
    if T_pad != T:
        x2 = jnp.pad(x2, ((0, T_pad - T), (0, 0)))

    if ti is None:
        ti = _pick_ti(I, H, tm_eff,
                      w_itemsize=jnp.dtype(w_gate.dtype).itemsize,
                      x_itemsize=jnp.dtype(x2.dtype).itemsize,
                      ti_max=params["ti_max"],
                      vmem_budget=params["vmem"])
    assert ti % 64 == 0, "ti must be a multiple of 64 (lane/sublane tiling)"

    # Pad the intermediate dimension to a multiple of ti (zero columns/rows
    # contribute exactly 0 to the output).
    I_pad = _round_up(I, ti)
    wgu = _pack_gate_up(w_gate, w_up, ti, I_pad)
    wd = w_down if I_pad == I else jnp.pad(w_down, ((0, I_pad - I), (0, 0)))

    grid = (T_pad // tm_eff, I_pad // ti)

    kernel = functools.partial(_qwen_mlp_kernel, ti=ti)
    out = pl.pallas_call(
        kernel,
        out_shape=jax.ShapeDtypeStruct((T_pad, H), x2.dtype),
        grid_spec=pltpu.PrefetchScalarGridSpec(
            num_scalar_prefetch=0,
            grid=grid,
            in_specs=[
                pl.BlockSpec((tm_eff, H), lambda i, j: (i, 0)),   # x tile
                pl.BlockSpec((H, 2 * ti), lambda i, j: (0, j)),   # fused gate|up tile
                pl.BlockSpec((ti, H), lambda i, j: (j, 0)),       # down-proj tile
            ],
            out_specs=pl.BlockSpec((tm_eff, H), lambda i, j: (i, 0)),
            scratch_shapes=[pltpu.VMEM((tm_eff, H), jnp.float32)],
        ),
        compiler_params=pltpu.CompilerParams(
            dimension_semantics=("parallel", "arbitrary"),
            vmem_limit_bytes=params["vmem"],
        ),
    )(x2, wgu, wd)

    if T_pad != T:
        out = out[:T]
    return out.reshape(orig_shape)


def qwen_mlp_ref(x, w_gate, w_up, w_down):
    xf = x.astype(jnp.float32)
    gate = xf @ w_gate.astype(jnp.float32)
    up = xf @ w_up.astype(jnp.float32)
    h = (gate * jax.nn.sigmoid(gate)) * up
    return (h @ w_down.astype(jnp.float32)).astype(x.dtype)


if __name__ == "__main__":
    # Small shapes consistent with the module: num_tokens=20, hidden=128,
    # intermediate=384 (PyTorch MergedColumnParallelLinear weight [2I, H] is
    # kept transposed / split into gate [H, I] and up [H, I]).
    T, H, I = 20, 128, 384
    key = jax.random.PRNGKey(0)
    kx, kg, ku, kd = jax.random.split(key, 4)

    x32 = jax.random.normal(kx, (T, H), dtype=jnp.float32)
    wg32 = jax.random.normal(kg, (H, I), dtype=jnp.float32) * 0.05
    wu32 = jax.random.normal(ku, (H, I), dtype=jnp.float32) * 0.05
    wd32 = jax.random.normal(kd, (I, H), dtype=jnp.float32) * 0.05

    # ---- f32 check; explicit ti=256 exercises I-padding (384 -> 512) and the
    # multi-step reduction with token padding (20 -> 32). ----
    out32 = jax.block_until_ready(qwen_mlp(x32, wg32, wu32, wd32, ti=256))
    ref32 = qwen_mlp_ref(x32, wg32, wu32, wd32)
    assert out32.shape == (T, H)
    assert jnp.allclose(out32, ref32, atol=1e-3, rtol=1e-3), "f32 mismatch"

    # ---- bf16 check (the intended fast path: bf16 matmuls, f32 accumulation),
    # with auto per-generation tile selection. ----
    xb = x32.astype(jnp.bfloat16)
    wgb = wg32.astype(jnp.bfloat16)
    wub = wu32.astype(jnp.bfloat16)
    wdb = wd32.astype(jnp.bfloat16)

    outb = jax.block_until_ready(qwen_mlp(xb, wgb, wub, wdb))
    refb = qwen_mlp_ref(xb, wgb, wub, wdb)
    assert outb.shape == (T, H)
    assert jnp.allclose(outb.astype(jnp.float32), refb.astype(jnp.float32),
                        atol=2e-2, rtol=5e-2), "bf16 mismatch"

    print("KERNEL_OK")
</pallas_src>

<mosaic_0001>
module attributes {stable_mosaic.version = 11 : i64} {
  func.func @_qwen_mlp_kernel(%arg0: i32, %arg1: i32, %arg2: memref<32x128xf32, #tpu.memory_space<vmem>>, %arg3: memref<128x512xf32, #tpu.memory_space<vmem>>, %arg4: memref<256x128xf32, #tpu.memory_space<vmem>>, %arg5: memref<32x128xf32, #tpu.memory_space<vmem>>, %arg6: memref<32x128xf32, #tpu.memory_space<vmem>>) attributes {dimension_semantics = [#tpu.dimension_semantics<parallel>, #tpu.dimension_semantics<arbitrary>], iteration_bounds = array<i64: 1, 2>, scalar_prefetch = 0 : i64, scratch_operands = 1 : i64, tpu.core_type = #tpu.core_type<tc>, window_params = [{transform_indices = @transform_0, window_bounds = array<i64: 32, 128>}, {transform_indices = @transform_1, window_bounds = array<i64: 128, 512>}, {transform_indices = @transform_2, window_bounds = array<i64: 256, 128>}, {transform_indices = @transform_3, window_bounds = array<i64: 32, 128>}]} {
    %c0 = arith.constant 0 : index
    %c0_0 = arith.constant 0 : index
    %0 = vector.load %arg2[%c0, %c0_0] : memref<32x128xf32, #tpu.memory_space<vmem>>, vector<32x128xf32>
    %c0_1 = arith.constant 0 : index
    %c0_2 = arith.constant 0 : index
    %1 = vector.load %arg3[%c0_1, %c0_2] : memref<128x512xf32, #tpu.memory_space<vmem>>, vector<128x512xf32>
    %cst = arith.constant dense<0.000000e+00> : vector<32x512xf32>
    %2 = tpu.matmul %0, %1, %cst {dimension_numbers = #tpu.dot_dimension_numbers<[1], [0], [0], [1], [0, 0, 1, 1], [], []>} : vector<32x128xf32>, vector<128x512xf32>, vector<32x512xf32> -> vector<32x512xf32>
    %3 = vector.extract_strided_slice %2 {offsets = [0, 0], sizes = [32, 256], strides = [1, 1]} : vector<32x512xf32> to vector<32x256xf32>
    %4 = vector.extract_strided_slice %2 {offsets = [0, 256], sizes = [32, 256], strides = [1, 1]} : vector<32x512xf32> to vector<32x256xf32>
    %5 = arith.negf %3 : vector<32x256xf32>
    %6 = math.exp %5 : vector<32x256xf32>
    %cst_3 = arith.constant 1.000000e+00 : f32
    %7 = vector.broadcast %cst_3 : f32 to vector<32x256xf32>
    %8 = arith.addf %7, %6 : vector<32x256xf32>
    %9 = arith.divf %7, %8 : vector<32x256xf32>
    %10 = arith.mulf %3, %9 : vector<32x256xf32>
    %11 = arith.mulf %10, %4 : vector<32x256xf32>
    %c0_4 = arith.constant 0 : index
    %c0_5 = arith.constant 0 : index
    %12 = vector.load %arg4[%c0_4, %c0_5] : memref<256x128xf32, #tpu.memory_space<vmem>>, vector<256x128xf32>
    %cst_6 = arith.constant dense<0.000000e+00> : vector<32x128xf32>
    %13 = tpu.matmul %11, %12, %cst_6 {dimension_numbers = #tpu.dot_dimension_numbers<[1], [0], [0], [1], [0, 0, 1, 1], [], []>} : vector<32x256xf32>, vector<256x128xf32>, vector<32x128xf32> -> vector<32x128xf32>
    %c0_i32 = arith.constant 0 : i32
    %14 = arith.cmpi eq, %arg1, %c0_i32 : i32
    %15 = arith.extui %14 : i1 to i32
    %c0_i32_7 = arith.constant 0 : i32
    %16 = arith.cmpi ne, %15, %c0_i32_7 : i32
    scf.if %16 {
      %c0_11 = arith.constant 0 : index
      %c0_12 = arith.constant 0 : index
      %23 = vector.load %arg6[%c0_11, %c0_12] : memref<32x128xf32, #tpu.memory_space<vmem>>, vector<32x128xf32>
      tpu.vector_store %arg6[%c0_11, %c0_12], %13 {strides = array<i32>} : memref<32x128xf32, #tpu.memory_space<vmem>>, vector<32x128xf32>,
    } else {
    }
    %c0_i32_8 = arith.constant 0 : i32
    %17 = arith.cmpi sgt, %arg1, %c0_i32_8 : i32
    %18 = arith.extui %17 : i1 to i32
    %c0_i32_9 = arith.constant 0 : i32
    %19 = arith.cmpi ne, %18, %c0_i32_9 : i32
    scf.if %19 {
      %c0_11 = arith.constant 0 : index
      %c0_12 = arith.constant 0 : index
      %23 = vector.load %arg6[%c0_11, %c0_12] : memref<32x128xf32, #tpu.memory_space<vmem>>, vector<32x128xf32>
      %24 = arith.addf %23, %13 : vector<32x128xf32>
      %c0_13 = arith.constant 0 : index
      %c0_14 = arith.constant 0 : index
      %25 = vector.load %arg6[%c0_13, %c0_14] : memref<32x128xf32, #tpu.memory_space<vmem>>, vector<32x128xf32>
      tpu.vector_store %arg6[%c0_13, %c0_14], %24 {strides = array<i32>} : memref<32x128xf32, #tpu.memory_space<vmem>>, vector<32x128xf32>,
    } else {
    }
    %c1_i32 = arith.constant 1 : i32
    %20 = arith.cmpi eq, %arg1, %c1_i32 : i32
    %21 = arith.extui %20 : i1 to i32
    %c0_i32_10 = arith.constant 0 : i32
    %22 = arith.cmpi ne, %21, %c0_i32_10 : i32
    scf.if %22 {
      %c0_11 = arith.constant 0 : index
      %c0_12 = arith.constant 0 : index
      %23 = vector.load %arg6[%c0_11, %c0_12] : memref<32x128xf32, #tpu.memory_space<vmem>>, vector<32x128xf32>
      %c0_13 = arith.constant 0 : index
      %c0_14 = arith.constant 0 : index
      %24 = vector.load %arg5[%c0_13, %c0_14] : memref<32x128xf32, #tpu.memory_space<vmem>>, vector<32x128xf32>
      tpu.vector_store %arg5[%c0_13, %c0_14], %23 {strides = array<i32>} : memref<32x128xf32, #tpu.memory_space<vmem>>, vector<32x128xf32>,
    } else {
    }
    return
  }
  func.func @transform_0(%arg0: i32, %arg1: i32) -> (i32, i32) {
    %c0_i32 = arith.constant 0 : i32
    %c0_i32_0 = arith.constant 0 : i32
    return %arg0, %c0_i32 : i32, i32
  }
  func.func @transform_1(%arg0: i32, %arg1: i32) -> (i32, i32) {
    %c0_i32 = arith.constant 0 : i32
    %c0_i32_0 = arith.constant 0 : i32
    return %c0_i32, %arg1 : i32, i32
  }
  func.func @transform_2(%arg0: i32, %arg1: i32) -> (i32, i32) {
    %c0_i32 = arith.constant 0 : i32
    %c0_i32_0 = arith.constant 0 : i32
    return %arg1, %c0_i32 : i32, i32
  }
  func.func @transform_3(%arg0: i32, %arg1: i32) -> (i32, i32) {
    %c0_i32 = arith.constant 0 : i32
    %c0_i32_0 = arith.constant 0 : i32
    return %arg0, %c0_i32 : i32, i32
  }
}

</mosaic_0001>

<llo_original>
// kernel: tpu_custom_call.1
$region0: #{tpu_custom_call.1}
  #allocation0 [shape = 'u32[]', space=smem, size = 0x4, offset = 0x4, fixed_abs, tag = 'smem constant byte address 0x4 - core index']
  #allocation1 [shape = 'u32[144,128]{1,0:T(1,128)}', space=vmem, size = 0x12000, scoped, tag = 'internal scratch']
  #allocation2 [shape = 'f32[32,128]{1,0:T(8,128)}', space=vmem, size = 0x4000, scoped, tag = 'scratch operand']
  %s0 = inlined_call_operand.hbm [shape: f32[32,128], index: 0, kind: input, shape index: {}]
  %s1 = inlined_call_operand.hbm [shape: f32[128,1024], index: 1, kind: input, shape index: {}]
  %s2 = inlined_call_operand.hbm [shape: f32[512,128], index: 2, kind: input, shape index: {}]
  %s3 = inlined_call_operand.hbm [shape: f32[32,128], index: 3, kind: output, shape index: {}]
  %s4 = sld [smem:[#allocation0]]
  $region69: #{tpu_custom_call.1} parent=0
    _
  %s6 = ssub.s32 1, %s4
  %s7 = scalar_select 0, %s6, %s4
  $region1: #{tpu_custom_call.1} parent=0
    #allocation3 [shape = 'u8[16384]{0}', space=vmem, size = 0x4000, scoped, tag = 'input window, operand 0, single buffered']
    #allocation4 [shape = 's32[2]{0}', space=sflag, size = 0x8, scoped, tag = 'scoped memory for tpu_custom_call.1']
    #allocation5 [shape = 's32[2]{0}', space=sflag, size = 0x8, scoped, tag = 'scoped memory for tpu_custom_call.1']
    #allocation6 [shape = 'u8[524288]{0}', space=vmem, size = 0x80000, scoped, tag = 'input window, operand 1']
    #allocation7 [shape = 's32[2]{0}', space=sflag, size = 0x8, scoped, tag = 'scoped memory for tpu_custom_call.1']
    #allocation8 [shape = 'u8[262144]{0}', space=vmem, size = 0x40000, scoped, tag = 'input window, operand 2']
    #allocation9 [shape = 'u8[16384]{0}', space=vmem, size = 0x4000, scoped, tag = 'output window, operand 0, single buffered']
    %8 = vsyncpa [#allocation4], 0
    %9 = vsyncpa [#allocation7], 0
    %s10 = scalar_lea.sflag [#allocation7], 1
    %11 = vsyncpa %s10, 0
    %12 = vsyncpa [#allocation5], 0
    loop: start=0, step=1, limit=4
    $region2: #{tpu_custom_call.1} parent=1 // loop_pre_header
      _
    $region3: #{tpu_custom_call.1} parent=1 // loop_header
      %s14 = sphi 0, %s18
      %p15 = scmp.ge.s32.totalorder %s14, 4
      %s21 = sphi 0, %s33
      %s22 = sphi 0, %s29
      %s23 = sphi 0, %s21
      %s24 = sphi 0, %s22
      %s25 = sphi 0, %s23
      %s26 = sphi 0, %s24
      %s36 = sphi 0, %s38
      %s39 = sphi 0, %s36
      %s40 = sphi 0, %s39
      %s56 = sphi 0, %s40
      %s62 = sphi 0, %s64
      %s65 = sphi 0, %s62
      %s66 = sphi 0, %s65
      %s82 = sphi 0, %s66
      %s88 = sphi 0, %s90
      %s91 = sphi 0, %s88
      %s92 = sphi 0, %s91
      %s108 = sphi 0, %s92
      %s114 = sphi 0, %s116
      %s117 = sphi 0, %s114
      %s118 = sphi 0, %s117
      %s134 = sphi 0, %s118
    $region4: #{tpu_custom_call.1} parent=1 // loop_header_branch
      %17 = sbr.rel (%p15) target = $region8
    $region5: #{tpu_custom_call.1} parent=1 // loop_body
      %s19 = ssub.s32 %s14, 1
      %s20 = ssub.s32 %s14, 2
      %s27 = sadd.s32 1, %s22
      %p28 = scmp.ge.s32.totalorder %s27, 2
      %s29 = scalar_select %p28, 0, %s27
      %s30 = sadd.s32 1, %s21
      %s31 = scalar_select %p28, %s30, %s21
      %p32 = scmp.ge.s32.totalorder %s31, 1
      %s33 = scalar_select %p32, 0, %s31
      %s34 = ssub.s32 %s21, %s33
      %p35 = scmp.eq.s32.totalorder %s34, 0
      %s37 = sadd.s32 %s36, 1
      %s38 = scalar_select %p35, %s36, %s37
      %p41 = pneg %p35
      %p42 = scmp.eq.s32.totalorder %s14, 1
      %p43 = por %p41, %p42
      %p44 = scmp.ne.s32.totalorder %s36, %s39
      %p45 = scmp.eq.s32.totalorder %s14, 0
      %p46 = por %p44, %p45
      %p47 = scmp.ne.s32.totalorder %s36, %s39
      %p48 = scmp.eq.s32.totalorder %s19, 1
      %p49 = por %p47, %p48
      %p50 = scmp.ne.s32.totalorder %s39, %s40
      %p51 = scmp.eq.s32.totalorder %s19, 0
      %p52 = por %p50, %p51
      %p53 = scmp.ne.s32.totalorder %s39, %s40
      %p54 = scmp.eq.s32.totalorder %s20, 1
      %p55 = por %p53, %p54
      %p57 = scmp.ne.s32.totalorder %s40, %s56
      %p58 = scmp.eq.s32.totalorder %s20, 0
      %p59 = por %p57, %p58
      %s60 = ssub.s32 %s22, %s29
      %p61 = scmp.eq.s32.totalorder %s60, 0
      %s63 = sadd.s32 %s62, 1
      %s64 = scalar_select %p61, %s62, %s63
      %p67 = pneg %p61
      %p68 = scmp.eq.s32.totalorder %s14, 1
      %p69 = por %p67, %p68
      %p70 = scmp.ne.s32.totalorder %s62, %s65
      %p71 = scmp.eq.s32.totalorder %s14, 0
      %p72 = por %p70, %p71
      %p73 = scmp.ne.s32.totalorder %s62, %s65
      %p74 = scmp.eq.s32.totalorder %s19, 1
      %p75 = por %p73, %p74
      %p76 = scmp.ne.s32.totalorder %s65, %s66
      %p77 = scmp.eq.s32.totalorder %s19, 0
      %p78 = por %p76, %p77
      %p79 = scmp.ne.s32.totalorder %s65, %s66
      %p80 = scmp.eq.s32.totalorder %s20, 1
      %p81 = por %p79, %p80
      %p83 = scmp.ne.s32.totalorder %s66, %s82
      %p84 = scmp.eq.s32.totalorder %s20, 0
      %p85 = por %p83, %p84
      %s86 = ssub.s32 %s22, %s29
      %p87 = scmp.eq.s32.totalorder %s86, 0
      %s89 = sadd.s32 %s88, 1
      %s90 = scalar_select %p87, %s88, %s89
      %p93 = pneg %p87
      %p94 = scmp.eq.s32.totalorder %s14, 1
      %p95 = por %p93, %p94
      %p96 = scmp.ne.s32.totalorder %s88, %s91
      %p97 = scmp.eq.s32.totalorder %s14, 0
      %p98 = por %p96, %p97
      %p99 = scmp.ne.s32.totalorder %s88, %s91
      %p100 = scmp.eq.s32.totalorder %s19, 1
      %p101 = por %p99, %p100
      %p102 = scmp.ne.s32.totalorder %s91, %s92
      %p103 = scmp.eq.s32.totalorder %s19, 0
      %p104 = por %p102, %p103
      %p105 = scmp.ne.s32.totalorder %s91, %s92
      %p106 = scmp.eq.s32.totalorder %s20, 1
      %p107 = por %p105, %p106
      %p109 = scmp.ne.s32.totalorder %s92, %s108
      %p110 = scmp.eq.s32.totalorder %s20, 0
      %p111 = por %p109, %p110
      %s112 = ssub.s32 %s21, %s33
      %p113 = scmp.eq.s32.totalorder %s112, 0
      %s115 = sadd.s32 %s114, 1
      %s116 = scalar_select %p113, %s114, %s115
      %p119 = pneg %p113
      %p120 = scmp.eq.s32.totalorder %s14, 1
      %p121 = por %p119, %p120
      %p122 = scmp.ne.s32.totalorder %s114, %s117
      %p123 = scmp.eq.s32.totalorder %s14, 0
      %p124 = por %p122, %p123
      %p125 = scmp.ne.s32.totalorder %s114, %s117
      %p126 = scmp.eq.s32.totalorder %s19, 1
      %p127 = por %p125, %p126
      %p128 = scmp.ne.s32.totalorder %s117, %s118
      %p129 = scmp.eq.s32.totalorder %s19, 0
      %p130 = por %p128, %p129
      %p131 = scmp.ne.s32.totalorder %s117, %s118
      %p132 = scmp.eq.s32.totalorder %s20, 1
      %p133 = por %p131, %p132
      %p135 = scmp.ne.s32.totalorder %s118, %s134
      %p136 = scmp.eq.s32.totalorder %s20, 0
      %p137 = por %p135, %p136
      %p138 = scmp.le.s32.totalorder 1, %s14
      %p139 = scmp.lt.s32.totalorder %s14, 3
      %p140 = pnand %p138, %p139
      %p141 = pneg %p140
      // Predicated region
      $region9: #{tpu_custom_call.1} parent=5 // pred_check
        _
      $region10: #{tpu_custom_call.1} parent=5 // pred_check_branch
        %143 = sbr.rel (%p140) target = $region12
      $region11: #{tpu_custom_call.1} parent=5 // pred_region
        %s144 = ssub.s32 %s14, 1
        // Predicated region
        $region13: #{tpu_custom_call.1} parent=11 // pred_check
          %p145 = pneg %p52
        $region14: #{tpu_custom_call.1} parent=11 // pred_check_branch
          %147 = sbr.rel (%p145) target = $region16
        $region15: #{tpu_custom_call.1} parent=11 // pred_region
          %s148 = smul.u32 4, %s23
          %s150 = ssub.s32 512, 512
          %151 = vsyncadd [#allocation4], %s150
          %s152 = smul.addr %s148, 128
          %s153 = scalar_lea.hbm %s0, %s152
          %s154 = sshll.u32 [#allocation3], 4
          %s155 = int_to_ptr.vmem [resolvable:$true] %s154
          %160 = dma.hbm_to_vmem [thread:$0]  %s153, 512, %s155, [#allocation4], 128, 128, 8
        $region16: #{tpu_custom_call.1} parent=11 // pred_fallthru
          _
      $region12: #{tpu_custom_call.1} parent=5 // pred_fallthru
        _
      %p161 = scmp.lt.s32.totalorder %s14, 2
      // Predicated region
      $region17: #{tpu_custom_call.1} parent=5 // pred_check
        %p162 = pneg %p161
      $region18: #{tpu_custom_call.1} parent=5 // pred_check_branch
        %164 = sbr.rel (%p162) target = $region20
      $region19: #{tpu_custom_call.1} parent=5 // pred_region
        // Predicated region
        $region21: #{tpu_custom_call.1} parent=19 // pred_check
          %p165 = pneg %p72
        $region22: #{tpu_custom_call.1} parent=19 // pred_check_branch
          %167 = sbr.rel (%p165) target = $region24
        $region23: #{tpu_custom_call.1} parent=19 // pred_region
          %s168 = sand.u32 %s14, 1
          %s169 = scalar_lea.sflag [#allocation7], %s168
          %s170 = sand.u32 %s62, 1
          %s171 = smul.addr %s170, 512
          %s172 = scalar_lea.vmem [#allocation6], %s171
          %s173 = smul.u32 4, %s22
          %s175 = ssub.s32 8192, 8192
          %176 = vsyncadd %s169, %s175
          %s177 = smul.addr %s173, 128
          %s178 = scalar_lea.hbm %s1, %s177
          %s179 = sshll.u32 %s172, 4
          %s180 = int_to_ptr.vmem [resolvable:$true] %s179
          %185 = dma.hbm_to_vmem [thread:$0]  %s178, 8192, %s180, %s169, 1024, 512, 32
        $region24: #{tpu_custom_call.1} parent=19 // pred_fallthru
          _
        // Predicated region
        $region25: #{tpu_custom_call.1} parent=19 // pred_check
          %p186 = pneg %p98
        $region26: #{tpu_custom_call.1} parent=19 // pred_check_branch
          %188 = sbr.rel (%p186) target = $region28
        $region27: #{tpu_custom_call.1} parent=19 // pred_region
          %s189 = sand.u32 %s14, 1
          %s190 = scalar_lea.sflag [#allocation7], %s189
          %s191 = sand.u32 %s88, 1
          %s192 = smul.addr %s191, 256
          %s193 = scalar_lea.vmem [#allocation8], %s192
          %s194 = smul.u32 32, %s22
          %s196 = ssub.s32 4096, 4096
          %197 = vsyncadd %s190, %s196
          %s198 = smul.addr %s194, 128
          %s199 = scalar_lea.hbm %s2, %s198
          %s200 = sshll.u32 %s193, 4
          %s201 = int_to_ptr.vmem [resolvable:$true] %s200
          %206 = dma.hbm_to_vmem [thread:$0]  %s199, 4096, %s201, %s190, 128, 128, 8
        $region28: #{tpu_custom_call.1} parent=19 // pred_fallthru
          _
      $region20: #{tpu_custom_call.1} parent=5 // pred_fallthru
        _
      %p207 = scmp.le.s32.totalorder 1, %s14
      %p208 = scmp.lt.s32.totalorder %s14, 3
      %p209 = pnand %p207, %p208
      %p210 = pneg %p209
      // Predicated region
      $region29: #{tpu_custom_call.1} parent=5 // pred_check
        _
      $region30: #{tpu_custom_call.1} parent=5 // pred_check_branch
        %212 = sbr.rel (%p209) target = $region32
      $region31: #{tpu_custom_call.1} parent=5 // pred_region
        %s213 = ssub.s32 %s14, 1
        // Predicated region
        $region33: #{tpu_custom_call.1} parent=31 // pred_check
          %p214 = pneg %p52
        $region34: #{tpu_custom_call.1} parent=31 // pred_check_branch
          %216 = sbr.rel (%p214) target = $region36
        $region35: #{tpu_custom_call.1} parent=31 // pred_region
          %217 = dma.done [#allocation4], 512
        $region36: #{tpu_custom_call.1} parent=31 // pred_fallthru
          _
        %s218 = sand.u32 %s19, 1
        %s219 = scalar_lea.sflag [#allocation7], %s218
        %s220 = sand.u32 %s65, 1
        %s221 = smul.addr %s220, 512
        %s222 = scalar_lea.vmem [#allocation6], %s221
        // Predicated region
        $region37: #{tpu_custom_call.1} parent=31 // pred_check
          %p223 = pneg %p78
        $region38: #{tpu_custom_call.1} parent=31 // pred_check_branch
          %225 = sbr.rel (%p223) target = $region40
        $region39: #{tpu_custom_call.1} parent=31 // pred_region
          %226 = dma.done %s219, 8192
        $region40: #{tpu_custom_call.1} parent=31 // pred_fallthru
          _
        %s227 = sand.u32 %s19, 1
        %s228 = scalar_lea.sflag [#allocation7], %s227
        %s229 = sand.u32 %s91, 1
        %s230 = smul.addr %s229, 256
        %s231 = scalar_lea.vmem [#allocation8], %s230
        // Predicated region
        $region41: #{tpu_custom_call.1} parent=31 // pred_check
          %p232 = pneg %p104
        $region42: #{tpu_custom_call.1} parent=31 // pred_check_branch
          %234 = sbr.rel (%p232) target = $region44
        $region43: #{tpu_custom_call.1} parent=31 // pred_region
          %235 = dma.done %s228, 4096
        $region44: #{tpu_custom_call.1} parent=31 // pred_fallthru
          _
        %p236 = pneg %p52
        %p237 = pneg %p49
        %s238 = sand.u32 %s19, 1
        %s239 = scalar_lea.sflag [#allocation7], %s238
        %s240 = sand.u32 %s65, 1
        %s241 = smul.addr %s240, 512
        %s242 = scalar_lea.vmem [#allocation6], %s241
        %p243 = pneg %p78
        %p244 = pneg %p75
        %s245 = sand.u32 %s19, 1
        %s246 = scalar_lea.sflag [#allocation7], %s245
        %s247 = sand.u32 %s91, 1
        %s248 = smul.addr %s247, 256
        %s249 = scalar_lea.vmem [#allocation8], %s248
        %p250 = pneg %p104
        %p251 = pneg %p101
        %p252 = pneg %p130
        %p253 = pneg %p127
        %s254 = smul.u32 4, %s23
        %s255 = smul.u32 4, %s24
        %s256 = smul.u32 32, %s24
        %s257 = smul.u32 4, %s23
        %v258 = vld [vmem:[#allocation3] sm:$0xff]
        %v259 = vld [vmem:[#allocation3 + $0x8] sm:$0xff]
        %v260 = vld [vmem:[#allocation3 + $0x10] sm:$0xff]
        %v261 = vld [vmem:[#allocation3 + $0x18] sm:$0xff]
        %v262 = vld [vmem:[%s222] sm:$0xff]
        %v263 = vld [vmem:[%s222 + $0x8] sm:$0xff]
        %v264 = vld [vmem:[%s222 + $0x10] sm:$0xff]
        %v265 = vld [vmem:[%s222 + $0x18] sm:$0xff]
        %v266 = vld [vmem:[%s222 + $0x20] sm:$0xff]
        %v267 = vld [vmem:[%s222 + $0x28] sm:$0xff]
        %v268 = vld [vmem:[%s222 + $0x30] sm:$0xff]
        %v269 = vld [vmem:[%s222 + $0x38] sm:$0xff]
        %v270 = vld [vmem:[%s222 + $0x40] sm:$0xff]
        %v271 = vld [vmem:[%s222 + $0x48] sm:$0xff]
        %v272 = vld [vmem:[%s222 + $0x50] sm:$0xff]
        %v273 = vld [vmem:[%s222 + $0x58] sm:$0xff]
        %v274 = vld [vmem:[%s222 + $0x60] sm:$0xff]
        %v275 = vld [vmem:[%s222 + $0x68] sm:$0xff]
        %v276 = vld [vmem:[%s222 + $0x70] sm:$0xff]
        %v277 = vld [vmem:[%s222 + $0x78] sm:$0xff]
        %v278 = vld [vmem:[%s222 + $0x80] sm:$0xff]
        %v279 = vld [vmem:[%s222 + $0x88] sm:$0xff]
        %v280 = vld [vmem:[%s222 + $0x90] sm:$0xff]
        %v281 = vld [vmem:[%s222 + $0x98] sm:$0xff]
        %v282 = vld [vmem:[%s222 + $0xa0] sm:$0xff]
        %v283 = vld [vmem:[%s222 + $0xa8] sm:$0xff]
        %v284 = vld [vmem:[%s222 + $0xb0] sm:$0xff]
        %v285 = vld [vmem:[%s222 + $0xb8] sm:$0xff]
        %v286 = vld [vmem:[%s222 + $0xc0] sm:$0xff]
        %v287 = vld [vmem:[%s222 + $0xc8] sm:$0xff]
        %v288 = vld [vmem:[%s222 + $0xd0] sm:$0xff]
        %v289 = vld [vmem:[%s222 + $0xd8] sm:$0xff]
        %v290 = vld [vmem:[%s222 + $0xe0] sm:$0xff]
        %v291 = vld [vmem:[%s222 + $0xe8] sm:$0xff]
        %v292 = vld [vmem:[%s222 + $0xf0] sm:$0xff]
        %v293 = vld [vmem:[%s222 + $0xf8] sm:$0xff]
        %v294 = vld [vmem:[%s222 + $0x100] sm:$0xff]
        %v295 = vld [vmem:[%s222 + $0x108] sm:$0xff]
        %v296 = vld [vmem:[%s222 + $0x110] sm:$0xff]
        %v297 = vld [vmem:[%s222 + $0x118] sm:$0xff]
        %v298 = vld [vmem:[%s222 + $0x120] sm:$0xff]
        %v299 = vld [vmem:[%s222 + $0x128] sm:$0xff]
        %v300 = vld [vmem:[%s222 + $0x130] sm:$0xff]
        %v301 = vld [vmem:[%s222 + $0x138] sm:$0xff]
        %v302 = vld [vmem:[%s222 + $0x140] sm:$0xff]
        %v303 = vld [vmem:[%s222 + $0x148] sm:$0xff]
        %v304 = vld [vmem:[%s222 + $0x150] sm:$0xff]
        %v305 = vld [vmem:[%s222 + $0x158] sm:$0xff]
        %v306 = vld [vmem:[%s222 + $0x160] sm:$0xff]
        %v307 = vld [vmem:[%s222 + $0x168] sm:$0xff]
        %v308 = vld [vmem:[%s222 + $0x170] sm:$0xff]
        %v309 = vld [vmem:[%s222 + $0x178] sm:$0xff]
        %v310 = vld [vmem:[%s222 + $0x180] sm:$0xff]
        %v311 = vld [vmem:[%s222 + $0x188] sm:$0xff]
        %v312 = vld [vmem:[%s222 + $0x190] sm:$0xff]
        %v313 = vld [vmem:[%s222 + $0x198] sm:$0xff]
        %v314 = vld [vmem:[%s222 + $0x1a0] sm:$0xff]
        %v315 = vld [vmem:[%s222 + $0x1a8] sm:$0xff]
        %v316 = vld [vmem:[%s222 + $0x1b0] sm:$0xff]
        %v317 = vld [vmem:[%s222 + $0x1b8] sm:$0xff]
        %v318 = vld [vmem:[%s222 + $0x1c0] sm:$0xff]
        %v319 = vld [vmem:[%s222 + $0x1c8] sm:$0xff]
        %v320 = vld [vmem:[%s222 + $0x1d0] sm:$0xff]
        %v321 = vld [vmem:[%s222 + $0x1d8] sm:$0xff]
        %v322 = vld [vmem:[%s222 + $0x1e0] sm:$0xff]
        %v323 = vld [vmem:[%s222 + $0x1e8] sm:$0xff]
        %v324 = vld [vmem:[%s222 + $0x1f0] sm:$0xff]
        %v325 = vld [vmem:[%s222 + $0x1f8] sm:$0xff]
        %326 = vmatprep.subr.mxu0 %v263
        %327 = vmatpush1.msra.mxu0 %v262
        %328 = vmatprep.subr.mxu0 %v267
        %329 = vmatpush1.msra.mxu0 %v266
        %330 = vmatprep.subr.mxu0 %v271
        %331 = vmatpush1.msra.mxu0 %v270
        %332 = vmatprep.subr.mxu0 %v275
        %333 = vmatpush1.msra.mxu0 %v274
        %334 = vmatprep.subr.mxu0 %v279
        %335 = vmatpush1.msra.mxu0 %v278
        %336 = vmatprep.subr.mxu0 %v283
        %337 = vmatpush1.msra.mxu0 %v282
        %338 = vmatprep.subr.mxu0 %v287
        %339 = vmatpush1.msra.mxu0 %v286
        %340 = vmatprep.subr.mxu0 %v291
        %341 = vmatpush1.msra.mxu0 %v290
        %342 = vmatprep.subr.mxu0 %v295
        %343 = vmatpush1.msra.mxu0 %v294
        %344 = vmatprep.subr.mxu0 %v299
        %345 = vmatpush1.msra.mxu0 %v298
        %346 = vmatprep.subr.mxu0 %v303
        %347 = vmatpush1.msra.mxu0 %v302
        %348 = vmatprep.subr.mxu0 %v307
        %349 = vmatpush1.msra.mxu0 %v306
        %350 = vmatprep.subr.mxu0 %v311
        %351 = vmatpush1.msra.mxu0 %v310
        %352 = vmatprep.subr.mxu0 %v315
        %353 = vmatpush1.msra.mxu0 %v314
        %354 = vmatprep.subr.mxu0 %v319
        %355 = vmatpush1.msra.mxu0 %v318
        %356 = vmatprep.subr.mxu0 %v323
        %357 = vmatpush1.msra.mxu0 %v322
        %358 = vmatprep.subr.mxu0 0.0
        %359 = vmatpush1.msra.mxu0 0.0
        %360 = vmatprep.subr.mxu0 0.0
        %361 = vmatpush1.msra.mxu0 0.0
        %362 = vmatprep.subr.mxu0 0.0
        %363 = vmatpush1.msra.mxu0 0.0
        %364 = vmatprep.subr.mxu0 0.0
        %365 = vmatpush1.msra.mxu0 0.0
        %366 = vmatprep.subr.mxu0 0.0
        %367 = vmatpush1.msra.mxu0 0.0
        %368 = vmatprep.subr.mxu0 0.0
        %369 = vmatpush1.msra.mxu0 0.0
        %370 = vmatprep.subr.mxu0 0.0
        %371 = vmatpush1.msra.mxu0 0.0
        %372 = vmatprep.subr.mxu0 0.0
        %373 = vmatpush1.msra.mxu0 0.0
        %374 = vmatprep.subr.mxu0 0.0
        %375 = vmatpush1.msra.mxu0 0.0
        %376 = vmatprep.subr.mxu0 0.0
        %377 = vmatpush1.msra.mxu0 0.0
        %378 = vmatprep.subr.mxu0 0.0
        %379 = vmatpush1.msra.mxu0 0.0
        %380 = vmatprep.subr.mxu0 0.0
        %381 = vmatpush1.msra.mxu0 0.0
        %382 = vmatprep.subr.mxu0 0.0
        %383 = vmatpush1.msra.mxu0 0.0
        %384 = vmatprep.subr.mxu0 0.0
        %385 = vmatpush1.msra.mxu0 0.0
        %386 = vmatprep.subr.mxu0 0.0
        %387 = vmatpush1.msra.mxu0 0.0
        %388 = vmatprep.subr.mxu0 0.0
        %389 = vmatpush1.msra.mxu0 0.0
        %390 = vmatprep.mubr.f32.mxu0 0.0
        %391 = vmatmul.mubr.f32.gmra.mrb[0].mxu0 %v258
        %v392 = vpop.f32.mrb[0].mxu0
        %v393 = vadd.f32 0.0, %v392
        %v394 = vpop.f32.mrb[0].mxu0
        %v395 = vadd.f32 0.0, %v394
        %396 = vmatprep.mubr.f32.mxu0 0.0
        %397 = vmatmul.mubr.f32.gmra.mrb[0].mxu0 %v259
        %v398 = vpop.f32.mrb[0].mxu0
        %v399 = vadd.f32 0.0, %v398
        %v400 = vpop.f32.mrb[0].mxu0
        %v401 = vadd.f32 0.0, %v400
        %402 = vmatprep.mubr.f32.mxu0 0.0
        %403 = vmatmul.mubr.f32.gmra.mrb[0].mxu0 %v260
        %v404 = vpop.f32.mrb[0].mxu0
        %v405 = vadd.f32 0.0, %v404
        %v406 = vpop.f32.mrb[0].mxu0
        %v407 = vadd.f32 0.0, %v406
        %408 = vmatprep.mubr.f32.mxu0 0.0
        %409 = vmatmul.mubr.f32.gmra.mrb[0].mxu0 %v261
        %v410 = vpop.f32.mrb[0].mxu0
        %v411 = vadd.f32 0.0, %v410
        %v412 = vpop.f32.mrb[0].mxu0
        %v413 = vadd.f32 0.0, %v412
        %414 = vdwg.mxu0
        %415 = vmatprep.subr.mxu0 %v265
        %416 = vmatpush1.msra.mxu0 %v264
        %417 = vmatprep.subr.mxu0 %v269
        %418 = vmatpush1.msra.mxu0 %v268
        %419 = vmatprep.subr.mxu0 %v273
        %420 = vmatpush1.msra.mxu0 %v272
        %421 = vmatprep.subr.mxu0 %v277
        %422 = vmatpush1.msra.mxu0 %v276
        %423 = vmatprep.subr.mxu0 %v281
        %424 = vmatpush1.msra.mxu0 %v280
        %425 = vmatprep.subr.mxu0 %v285
        %426 = vmatpush1.msra.mxu0 %v284
        %427 = vmatprep.subr.mxu0 %v289
        %428 = vmatpush1.msra.mxu0 %v288
        %429 = vmatprep.subr.mxu0 %v293
        %430 = vmatpush1.msra.mxu0 %v292
        %431 = vmatprep.subr.mxu0 %v297
        %432 = vmatpush1.msra.mxu0 %v296
        %433 = vmatprep.subr.mxu0 %v301
        %434 = vmatpush1.msra.mxu0 %v300
        %435 = vmatprep.subr.mxu0 %v305
        %436 = vmatpush1.msra.mxu0 %v304
        %437 = vmatprep.subr.mxu0 %v309
        %438 = vmatpush1.msra.mxu0 %v308
        %439 = vmatprep.subr.mxu0 %v313
        %440 = vmatpush1.msra.mxu0 %v312
        %441 = vmatprep.subr.mxu0 %v317
        %442 = vmatpush1.msra.mxu0 %v316
        %443 = vmatprep.subr.mxu0 %v321
        %444 = vmatpush1.msra.mxu0 %v320
        %445 = vmatprep.subr.mxu0 %v325
        %446 = vmatpush1.msra.mxu0 %v324
        %447 = vmatprep.subr.mxu0 0.0
        %448 = vmatpush1.msra.mxu0 0.0
        %449 = vmatprep.subr.mxu0 0.0
        %450 = vmatpush1.msra.mxu0 0.0
        %451 = vmatprep.subr.mxu0 0.0
        %452 = vmatpush1.msra.mxu0 0.0
        %453 = vmatprep.subr.mxu0 0.0
        %454 = vmatpush1.msra.mxu0 0.0
        %455 = vmatprep.subr.mxu0 0.0
        %456 = vmatpush1.msra.mxu0 0.0
        %457 = vmatprep.subr.mxu0 0.0
        %458 = vmatpush1.msra.mxu0 0.0
        %459 = vmatprep.subr.mxu0 0.0
        %460 = vmatpush1.msra.mxu0 0.0
        %461 = vmatprep.subr.mxu0 0.0
        %462 = vmatpush1.msra.mxu0 0.0
        %463 = vmatprep.subr.mxu0 0.0
        %464 = vmatpush1.msra.mxu0 0.0
        %465 = vmatprep.subr.mxu0 0.0
        %466 = vmatpush1.msra.mxu0 0.0
        %467 = vmatprep.subr.mxu0 0.0
        %468 = vmatpush1.msra.mxu0 0.0
        %469 = vmatprep.subr.mxu0 0.0
        %470 = vmatpush1.msra.mxu0 0.0
        %471 = vmatprep.subr.mxu0 0.0
        %472 = vmatpush1.msra.mxu0 0.0
        %473 = vmatprep.subr.mxu0 0.0
        %474 = vmatpush1.msra.mxu0 0.0
        %475 = vmatprep.subr.mxu0 0.0
        %476 = vmatpush1.msra.mxu0 0.0
        %477 = vmatprep.subr.mxu0 0.0
        %478 = vmatpush1.msra.mxu0 0.0
        %479 = vmatprep.mubr.f32.mxu0 0.0
        %480 = vmatmul.mubr.f32.gmra.mrb[0].mxu0 %v258
        %v481 = vpop.f32.mrb[0].mxu0
        %v482 = vadd.f32 0.0, %v481
        %v483 = vpop.f32.mrb[0].mxu0
        %v484 = vadd.f32 0.0, %v483
        %485 = vmatprep.mubr.f32.mxu0 0.0
        %486 = vmatmul.mubr.f32.gmra.mrb[0].mxu0 %v259
        %v487 = vpop.f32.mrb[0].mxu0
        %v488 = vadd.f32 0.0, %v487
        %v489 = vpop.f32.mrb[0].mxu0
        %v490 = vadd.f32 0.0, %v489
        %491 = vmatprep.mubr.f32.mxu0 0.0
        %492 = vmatmul.mubr.f32.gmra.mrb[0].mxu0 %v260
        %v493 = vpop.f32.mrb[0].mxu0
        %v494 = vadd.f32 0.0, %v493
        %v495 = vpop.f32.mrb[0].mxu0
        %v496 = vadd.f32 0.0, %v495
        %497 = vmatprep.mubr.f32.mxu0 0.0
        %498 = vmatmul.mubr.f32.gmra.mrb[0].mxu0 %v261
        %v499 = vpop.f32.mrb[0].mxu0
        %v500 = vadd.f32 0.0, %v499
        %v501 = vpop.f32.mrb[0].mxu0
        %v502 = vadd.f32 0.0, %v501
        %503 = vdwg.mxu0
        %v504 = vxor.u32 %v393, 2147483648
        %v505 = vxor.u32 %v395, 2147483648
        %v506 = vxor.u32 %v399, 2147483648
        %v507 = vxor.u32 %v401, 2147483648
        %v508 = vxor.u32 %v405, 2147483648
        %v509 = vxor.u32 %v407, 2147483648
        %v510 = vxor.u32 %v411, 2147483648
        %v511 = vxor.u32 %v413, 2147483648
        %v512 = vmul.f32 %v504, 1.442695
        %v513 = vpow.pop %v512
        %v514 = vmul.f32 %v505, 1.442695
        %v515 = vpow.pop %v514
        %v516 = vmul.f32 %v506, 1.442695
        %v517 = vpow.pop %v516
        %v518 = vmul.f32 %v507, 1.442695
        %v519 = vpow.pop %v518
        %v520 = vmul.f32 %v508, 1.442695
        %v521 = vpow.pop %v520
        %v522 = vmul.f32 %v509, 1.442695
        %v523 = vpow.pop %v522
        %v524 = vmul.f32 %v510, 1.442695
        %v525 = vpow.pop %v524
        %v526 = vmul.f32 %v511, 1.442695
        %v527 = vpow.pop %v526
        %v528 = vadd.f32 %v513, 1.0
        %v529 = vadd.f32 %v515, 1.0
        %v530 = vadd.f32 %v517, 1.0
        %v531 = vadd.f32 %v519, 1.0
        %v532 = vadd.f32 %v521, 1.0
        %v533 = vadd.f32 %v523, 1.0
        %v534 = vadd.f32 %v525, 1.0
        %v535 = vadd.f32 %v527, 1.0
        %v536 = vrcp.pop %v528
        %v537 = vmul.f32 1.0, %v536
        %v538 = vrcp.pop %v529
        %v539 = vmul.f32 1.0, %v538
        %v540 = vrcp.pop %v530
        %v541 = vmul.f32 1.0, %v540
        %v542 = vrcp.pop %v531
        %v543 = vmul.f32 1.0, %v542
        %v544 = vrcp.pop %v532
        %v545 = vmul.f32 1.0, %v544
        %v546 = vrcp.pop %v533
        %v547 = vmul.f32 1.0, %v546
        %v548 = vrcp.pop %v534
        %v549 = vmul.f32 1.0, %v548
        %v550 = vrcp.pop %v535
        %v551 = vmul.f32 1.0, %v550
        %v552 = vmul.f32 %v393, %v537
        %v553 = vmul.f32 %v395, %v539
        %v554 = vmul.f32 %v399, %v541
        %v555 = vmul.f32 %v401, %v543
        %v556 = vmul.f32 %v405, %v545
        %v557 = vmul.f32 %v407, %v547
        %v558 = vmul.f32 %v411, %v549
        %v559 = vmul.f32 %v413, %v551
        %v560 = vmul.f32 %v552, %v482
        %v561 = vmul.f32 %v553, %v484
        %v562 = vmul.f32 %v554, %v488
        %v563 = vmul.f32 %v555, %v490
        %v564 = vmul.f32 %v556, %v494
        %v565 = vmul.f32 %v557, %v496
        %v566 = vmul.f32 %v558, %v500
        %v567 = vmul.f32 %v559, %v502
        %v568 = vld [vmem:[%s231] sm:$0xff]
        %v569 = vld [vmem:[%s231 + $0x8] sm:$0xff]
        %v570 = vld [vmem:[%s231 + $0x10] sm:$0xff]
        %v571 = vld [vmem:[%s231 + $0x18] sm:$0xff]
        %v572 = vld [vmem:[%s231 + $0x20] sm:$0xff]
        %v573 = vld [vmem:[%s231 + $0x28] sm:$0xff]
        %v574 = vld [vmem:[%s231 + $0x30] sm:$0xff]
        %v575 = vld [vmem:[%s231 + $0x38] sm:$0xff]
        %v576 = vld [vmem:[%s231 + $0x40] sm:$0xff]
        %v577 = vld [vmem:[%s231 + $0x48] sm:$0xff]
        %v578 = vld [vmem:[%s231 + $0x50] sm:$0xff]
        %v579 = vld [vmem:[%s231 + $0x58] sm:$0xff]
        %v580 = vld [vmem:[%s231 + $0x60] sm:$0xff]
        %v581 = vld [vmem:[%s231 + $0x68] sm:$0xff]
        %v582 = vld [vmem:[%s231 + $0x70] sm:$0xff]
        %v583 = vld [vmem:[%s231 + $0x78] sm:$0xff]
        %v584 = vld [vmem:[%s231 + $0x80] sm:$0xff]
        %v585 = vld [vmem:[%s231 + $0x88] sm:$0xff]
        %v586 = vld [vmem:[%s231 + $0x90] sm:$0xff]
        %v587 = vld [vmem:[%s231 + $0x98] sm:$0xff]
        %v588 = vld [vmem:[%s231 + $0xa0] sm:$0xff]
        %v589 = vld [vmem:[%s231 + $0xa8] sm:$0xff]
        %v590 = vld [vmem:[%s231 + $0xb0] sm:$0xff]
        %v591 = vld [vmem:[%s231 + $0xb8] sm:$0xff]
        %v592 = vld [vmem:[%s231 + $0xc0] sm:$0xff]
        %v593 = vld [vmem:[%s231 + $0xc8] sm:$0xff]
        %v594 = vld [vmem:[%s231 + $0xd0] sm:$0xff]
        %v595 = vld [vmem:[%s231 + $0xd8] sm:$0xff]
        %v596 = vld [vmem:[%s231 + $0xe0] sm:$0xff]
        %v597 = vld [vmem:[%s231 + $0xe8] sm:$0xff]
        %v598 = vld [vmem:[%s231 + $0xf0] sm:$0xff]
        %v599 = vld [vmem:[%s231 + $0xf8] sm:$0xff]
        %600 = vmatprep.subr.mxu0 0.0
        %601 = vmatpush1.msra.mxu0 %v568
        %602 = vmatprep.subr.mxu0 0.0
        %603 = vmatpush1.msra.mxu0 %v569
        %604 = vmatprep.subr.mxu0 0.0
        %605 = vmatpush1.msra.mxu0 %v570
        %606 = vmatprep.subr.mxu0 0.0
        %607 = vmatpush1.msra.mxu0 %v571
        %608 = vmatprep.subr.mxu0 0.0
        %609 = vmatpush1.msra.mxu0 %v572
        %610 = vmatprep.subr.mxu0 0.0
        %611 = vmatpush1.msra.mxu0 %v573
        %612 = vmatprep.subr.mxu0 0.0
        %613 = vmatpush1.msra.mxu0 %v574
        %614 = vmatprep.subr.mxu0 0.0
        %615 = vmatpush1.msra.mxu0 %v575
        %616 = vmatprep.subr.mxu0 0.0
        %617 = vmatpush1.msra.mxu0 %v576
        %618 = vmatprep.subr.mxu0 0.0
        %619 = vmatpush1.msra.mxu0 %v577
        %620 = vmatprep.subr.mxu0 0.0
        %621 = vmatpush1.msra.mxu0 %v578
        %622 = vmatprep.subr.mxu0 0.0
        %623 = vmatpush1.msra.mxu0 %v579
        %624 = vmatprep.subr.mxu0 0.0
        %625 = vmatpush1.msra.mxu0 %v580
        %626 = vmatprep.subr.mxu0 0.0
        %627 = vmatpush1.msra.mxu0 %v581
        %628 = vmatprep.subr.mxu0 0.0
        %629 = vmatpush1.msra.mxu0 %v582
        %630 = vmatprep.subr.mxu0 0.0
        %631 = vmatpush1.msra.mxu0 %v583
        %632 = vmatprep.subr.mxu0 0.0
        %633 = vmatpush1.msra.mxu0 %v584
        %634 = vmatprep.subr.mxu0 0.0
        %635 = vmatpush1.msra.mxu0 %v585
        %636 = vmatprep.subr.mxu0 0.0
        %637 = vmatpush1.msra.mxu0 %v586
        %638 = vmatprep.subr.mxu0 0.0
        %639 = vmatpush1.msra.mxu0 %v587
        %640 = vmatprep.subr.mxu0 0.0
        %641 = vmatpush1.msra.mxu0 %v588
        %642 = vmatprep.subr.mxu0 0.0
        %643 = vmatpush1.msra.mxu0 %v589
        %644 = vmatprep.subr.mxu0 0.0
        %645 = vmatpush1.msra.mxu0 %v590
        %646 = vmatprep.subr.mxu0 0.0
        %647 = vmatpush1.msra.mxu0 %v591
        %648 = vmatprep.subr.mxu0 0.0
        %649 = vmatpush1.msra.mxu0 %v592
        %650 = vmatprep.subr.mxu0 0.0
        %651 = vmatpush1.msra.mxu0 %v593
        %652 = vmatprep.subr.mxu0 0.0
        %653 = vmatpush1.msra.mxu0 %v594
        %654 = vmatprep.subr.mxu0 0.0
        %655 = vmatpush1.msra.mxu0 %v595
        %656 = vmatprep.subr.mxu0 0.0
        %657 = vmatpush1.msra.mxu0 %v596
        %658 = vmatprep.subr.mxu0 0.0
        %659 = vmatpush1.msra.mxu0 %v597
        %660 = vmatprep.subr.mxu0 0.0
        %661 = vmatpush1.msra.mxu0 %v598
        %662 = vmatprep.subr.mxu0 0.0
        %663 = vmatpush1.msra.mxu0 %v599
        %664 = vmatprep.mubr.f32.mxu0 %v561
        %665 = vmatmul.mubr.f32.gmra.mrb[0].mxu0 %v560
        %v666 = vpop.f32.mrb[0].mxu0
        %v667 = vadd.f32 0.0, %v666
        %v668 = vpop.f32.mrb[0].mxu0
        %669 = vmatprep.mubr.f32.mxu0 %v563
        %670 = vmatmul.mubr.f32.gmra.mrb[0].mxu0 %v562
        %v671 = vpop.f32.mrb[0].mxu0
        %v672 = vadd.f32 0.0, %v671
        %v673 = vpop.f32.mrb[0].mxu0
        %674 = vmatprep.mubr.f32.mxu0 %v565
        %675 = vmatmul.mubr.f32.gmra.mrb[0].mxu0 %v564
        %v676 = vpop.f32.mrb[0].mxu0
        %v677 = vadd.f32 0.0, %v676
        %v678 = vpop.f32.mrb[0].mxu0
        %679 = vmatprep.mubr.f32.mxu0 %v567
        %680 = vmatmul.mubr.f32.gmra.mrb[0].mxu0 %v566
        %v681 = vpop.f32.mrb[0].mxu0
        %v682 = vadd.f32 0.0, %v681
        %v683 = vpop.f32.mrb[0].mxu0
        %684 = vdwg.mxu0
        %p685 = scmp.eq.s32.totalorder %s24, 0
        // Predicated region
        $region45: #{tpu_custom_call.1} parent=31 // pred_check
          %p686 = pneg %p685
        $region46: #{tpu_custom_call.1} parent=31 // pred_check_branch
          %688 = sbr.rel (%p686) target = $region48
        $region47: #{tpu_custom_call.1} parent=31 // pred_region
          %689 = vst [vmem:[#allocation2] sm:$0xff] %v667
          %690 = vst [vmem:[#allocation2 + $0x8] sm:$0xff] %v672
          %691 = vst [vmem:[#allocation2 + $0x10] sm:$0xff] %v677
          %692 = vst [vmem:[#allocation2 + $0x18] sm:$0xff] %v682
        $region48: #{tpu_custom_call.1} parent=31 // pred_fallthru
          _
        %p693 = scmp.gt.s32.totalorder %s24, 0
        // Predicated region
        $region49: #{tpu_custom_call.1} parent=31 // pred_check
          %p694 = pneg %p693
        $region50: #{tpu_custom_call.1} parent=31 // pred_check_branch
          %696 = sbr.rel (%p694) target = $region52
        $region51: #{tpu_custom_call.1} parent=31 // pred_region
          %v697 = vld [vmem:[#allocation2] sm:$0xff]
          %v698 = vld [vmem:[#allocation2 + $0x8] sm:$0xff]
          %v699 = vld [vmem:[#allocation2 + $0x10] sm:$0xff]
          %v700 = vld [vmem:[#allocation2 + $0x18] sm:$0xff]
          %v701 = vadd.f32 %v697, %v667
          %v702 = vadd.f32 %v698, %v672
          %v703 = vadd.f32 %v699, %v677
          %v704 = vadd.f32 %v700, %v682
          %705 = vst [vmem:[#allocation2] sm:$0xff] %v701
          %706 = vst [vmem:[#allocation2 + $0x8] sm:$0xff] %v702
          %707 = vst [vmem:[#allocation2 + $0x10] sm:$0xff] %v703
          %708 = vst [vmem:[#allocation2 + $0x18] sm:$0xff] %v704
        $region52: #{tpu_custom_call.1} parent=31 // pred_fallthru
          _
        %p709 = scmp.eq.s32.totalorder %s24, 1
        // Predicated region
        $region53: #{tpu_custom_call.1} parent=31 // pred_check
          %p710 = pneg %p709
        $region54: #{tpu_custom_call.1} parent=31 // pred_check_branch
          %712 = sbr.rel (%p710) target = $region56
        $region55: #{tpu_custom_call.1} parent=31 // pred_region
          %v713 = vld [vmem:[#allocation2] sm:$0xff]
          %v714 = vld [vmem:[#allocation2 + $0x8] sm:$0xff]
          %v715 = vld [vmem:[#allocation2 + $0x10] sm:$0xff]
          %v716 = vld [vmem:[#allocation2 + $0x18] sm:$0xff]
          %717 = vst [vmem:[#allocation9] sm:$0xff] %v713
          %718 = vst [vmem:[#allocation9 + $0x8] sm:$0xff] %v714
          %719 = vst [vmem:[#allocation9 + $0x10] sm:$0xff] %v715
          %720 = vst [vmem:[#allocation9 + $0x18] sm:$0xff] %v716
        $region56: #{tpu_custom_call.1} parent=31 // pred_fallthru
          _
        // Predicated region
        $region57: #{tpu_custom_call.1} parent=31 // pred_check
          %p721 = pneg %p127
        $region58: #{tpu_custom_call.1} parent=31 // pred_check_branch
          %723 = sbr.rel (%p721) target = $region60
        $region59: #{tpu_custom_call.1} parent=31 // pred_region
          %s724 = smul.u32 4, %s23
          %s726 = ssub.s32 512, 512
          %727 = vsyncadd [#allocation5], %s726
          %s728 = smul.addr %s724, 128
          %s729 = scalar_lea.hbm %s3, %s728
          %s730 = sshll.u32 [#allocation9], 4
          %s731 = int_to_ptr.vmem [resolvable:$true] %s730
          %736 = dma.vmem_to_hbm [thread:$0]  %s731, 512, %s729, [#allocation5], 128, 128, 8
        $region60: #{tpu_custom_call.1} parent=31 // pred_fallthru
          _
        // Predicated region
        $region61: #{tpu_custom_call.1} parent=31 // pred_check
          %p737 = pneg %p127
        $region62: #{tpu_custom_call.1} parent=31 // pred_check_branch
          %739 = sbr.rel (%p737) target = $region64
        $region63: #{tpu_custom_call.1} parent=31 // pred_region
          %740 = dma.done [#allocation5], 512
        $region64: #{tpu_custom_call.1} parent=31 // pred_fallthru
          _
      $region32: #{tpu_custom_call.1} parent=5 // pred_fallthru
        _
      %p741 = scmp.le.s32.totalorder 2, %s14
      // Predicated region
      $region65: #{tpu_custom_call.1} parent=5 // pred_check
        %p742 = pneg %p741
      $region66: #{tpu_custom_call.1} parent=5 // pred_check_branch
        %744 = sbr.rel (%p742) target = $region68
      $region67: #{tpu_custom_call.1} parent=5 // pred_region
        %s745 = ssub.s32 %s14, 2
      $region68: #{tpu_custom_call.1} parent=5 // pred_fallthru
        _
    $region6: #{tpu_custom_call.1} parent=1 // loop_footer
      %s18 = sadd.s32 1, %s14
    $region7: #{tpu_custom_call.1} parent=1 // loop_footer_branch
      %13 = sbr.rel target = $region3
    $region8: #{tpu_custom_call.1} parent=1 // loop_exit
      _
    %746 = vsyncpa [#allocation4], 1
    %s747 = scalar_lea.sflag [#allocation4], 1
    %748 = vsyncpa %s747, 1
    %749 = vsyncpa [#allocation7], 1
    %s750 = scalar_lea.sflag [#allocation7], 1
    %751 = vsyncpa %s750, 1
    %752 = vsyncpa [#allocation5], 1
    %s753 = scalar_lea.sflag [#allocation5], 1
    %754 = vsyncpa %s753, 1

</llo_original>
